<compile_context>
chip_gen: v6e
topology: v6e:2x2x1
jax: 0.10.0
libtpu: 0.0.40
codegen_flags: <defaults>
</compile_context>

<pallas_src>
import functools

import jax
import jax.numpy as jnp
from jax.experimental import pallas as pl
from jax.experimental.pallas import tpu as pltpu


# ----------------------------------------------------------------------------
# Kernel 1: conv (single im2col matmul) + optional oldskip add + BN partials.
#   weights : (Cout, KP)     bf16  (KP = KH*KW*Cin padded to a multiple of 16)
#   patches : (KP,  M)       bf16  (M = N*H*W on the lane dim)
#   skip    : (Cout, M)      f32   lane-dense output
#   stats   : (GM, Cout, 2)  f32   per-block [sum, sumsq] of ReLU(skip)
#   grid = (GM,)  'parallel' tiles over the pixel dim M.
# ----------------------------------------------------------------------------
def _store_skip_and_stats(acc, skip_ref, stats_ref):
    skip_ref[...] = acc                              # dense (Cout, TM) store
    y = jnp.maximum(acc, 0.0)                        # ReLU kept in-register only
    s = jnp.sum(y, axis=1, keepdims=True)            # (Cout, 1)  one-pass stats
    ss = jnp.sum(y * y, axis=1, keepdims=True)       # (Cout, 1)
    # Pack [sum | sumsq] into a (Cout, 2) tile via broadcast+select.
    col = jax.lax.broadcasted_iota(jnp.int32, (acc.shape[0], 2), 1)
    stats_ref[...] = jnp.where(col == 0, s, ss)[None]


def _conv_skip_stats_kernel(w_ref, p_ref, skip_ref, stats_ref):
    acc = jnp.dot(w_ref[...], p_ref[...], preferred_element_type=jnp.float32)
    _store_skip_and_stats(acc, skip_ref, stats_ref)


def _conv_skip_stats_oldskip_kernel(w_ref, p_ref, old_ref, skip_ref, stats_ref):
    acc = jnp.dot(w_ref[...], p_ref[...], preferred_element_type=jnp.float32)
    acc = acc + old_ref[...]
    _store_skip_and_stats(acc, skip_ref, stats_ref)


# ----------------------------------------------------------------------------
# Kernel 2: finalize BN stats (tiny) + fused ReLU + normalize, per M-block.
# ----------------------------------------------------------------------------
def _bn_relu_kernel(stats_ref, gamma_ref, beta_ref, skip_ref, out_ref, *,
                    count, eps):
    totals = jnp.sum(stats_ref[...], axis=0)         # (Cout, 2)
    inv_n = 1.0 / count
    mean = totals[:, 0:1] * inv_n                    # (Cout, 1)
    var = totals[:, 1:2] * inv_n - mean * mean       # biased variance
    inv = jax.lax.rsqrt(var + eps)
    scale = gamma_ref[...] * inv                     # (Cout, 1)
    shift = beta_ref[...] - mean * scale             # (Cout, 1)
    y = jnp.maximum(skip_ref[...], 0.0)              # ReLU fused here
    out_ref[...] = y * scale + shift


def _relu_kernel(skip_ref, out_ref):
    out_ref[...] = jnp.maximum(skip_ref[...], 0.0)


# ----------------------------------------------------------------------------
# Wrapper: ConvBlock.forward
# ----------------------------------------------------------------------------
def conv_block_forward(x_nchw, weight_oihw, gamma, beta, oldskip_nchw=None,
                       *, use_bn=True, skip=False, eps=1e-5):
    N, Cin, H, W = x_nchw.shape
    Cout, _, KH, KW = weight_oihw.shape
    M = N * H * W
    K0 = Cin * KH * KW

    # ---- wrapper-side layout plumbing: im2col in channels-on-sublanes form ----
    # 'same' zero padding (stride 1), matching PyTorch Conv2d(padding='same').
    ph_lo, ph_hi = (KH - 1) // 2, (KH - 1) - (KH - 1) // 2
    pw_lo, pw_hi = (KW - 1) // 2, (KW - 1) - (KW - 1) // 2
    xp = jnp.pad(x_nchw, ((0, 0), (0, 0), (ph_lo, ph_hi), (pw_lo, pw_hi)))

    taps = [xp[:, :, kh:kh + H, kw:kw + W]
            for kh in range(KH) for kw in range(KW)]            # each (N,Cin,H,W)
    patches = jnp.stack(taps, axis=2)                           # (N,Cin,T,H,W)
    patches = patches.transpose(1, 2, 0, 3, 4).reshape(K0, M)   # rows: (cin,kh,kw)

    w_flat = weight_oihw.reshape(Cout, K0)                      # same row order

    # Pad the contraction dim to a bf16-friendly multiple of 16 (zeros inert).
    KP = -(-K0 // 16) * 16
    if KP != K0:
        patches = jnp.pad(patches, ((0, KP - K0), (0, 0)))
        w_flat = jnp.pad(w_flat, ((0, 0), (0, KP - K0)))

    # bf16 MXU operands, f32 accumulation.
    patches = patches.astype(jnp.bfloat16)
    w_flat = w_flat.astype(jnp.bfloat16)

    # Pixel-dim tile: lane-dense (multiple of 128) and >= 2 grid steps when
    # possible so v7x's two TensorCores both get work.
    if M % 256 == 0 and M >= 512:
        TM = 256
    elif M % 128 == 0 and M >= 256:
        TM = 128
    else:
        TM = M
    GM = M // TM

    cparams = pltpu.CompilerParams(dimension_semantics=("parallel",))

    kernel1_out_shape = (
        jax.ShapeDtypeStruct((Cout, M), jnp.float32),           # skip (transposed)
        jax.ShapeDtypeStruct((GM, Cout, 2), jnp.float32),       # per-block stats
    )
    w_spec = pl.BlockSpec((Cout, KP), lambda m: (0, 0))
    p_spec = pl.BlockSpec((KP, TM), lambda m: (0, m))
    act_spec = pl.BlockSpec((Cout, TM), lambda m: (0, m))
    stats_spec = pl.BlockSpec((1, Cout, 2), lambda m: (m, 0, 0))

    if oldskip_nchw is None:
        # Specialized kernel: no zero 'oldskip' tensor is streamed through HBM.
        skip_t, stats = pl.pallas_call(
            _conv_skip_stats_kernel,
            out_shape=kernel1_out_shape,
            grid_spec=pltpu.PrefetchScalarGridSpec(
                num_scalar_prefetch=0, grid=(GM,),
                in_specs=[w_spec, p_spec],
                out_specs=[act_spec, stats_spec]),
            compiler_params=cparams,
        )(w_flat, patches)
    else:
        old_t = (oldskip_nchw.transpose(1, 0, 2, 3)
                 .reshape(Cout, M).astype(jnp.float32))
        skip_t, stats = pl.pallas_call(
            _conv_skip_stats_oldskip_kernel,
            out_shape=kernel1_out_shape,
            grid_spec=pltpu.PrefetchScalarGridSpec(
                num_scalar_prefetch=0, grid=(GM,),
                in_specs=[w_spec, p_spec, act_spec],
                out_specs=[act_spec, stats_spec]),
            compiler_params=cparams,
            input_output_aliases={2: 0},   # oldskip buffer becomes skip output
        )(w_flat, patches, old_t)

    if use_bn:
        out_t = pl.pallas_call(
            functools.partial(_bn_relu_kernel, count=float(M), eps=eps),
            out_shape=jax.ShapeDtypeStruct((Cout, M), jnp.float32),
            grid_spec=pltpu.PrefetchScalarGridSpec(
                num_scalar_prefetch=0, grid=(GM,),
                in_specs=[
                    pl.BlockSpec((GM, Cout, 2), lambda m: (0, 0, 0)),
                    pl.BlockSpec((Cout, 1), lambda m: (0, 0)),
                    pl.BlockSpec((Cout, 1), lambda m: (0, 0)),
                    act_spec,
                ],
                out_specs=act_spec),
            compiler_params=cparams,
        )(stats,
          gamma.reshape(Cout, 1).astype(jnp.float32),
          beta.reshape(Cout, 1).astype(jnp.float32),
          skip_t)
    else:
        out_t = pl.pallas_call(
            _relu_kernel,
            out_shape=jax.ShapeDtypeStruct((Cout, M), jnp.float32),
            grid_spec=pltpu.PrefetchScalarGridSpec(
                num_scalar_prefetch=0, grid=(GM,),
                in_specs=[act_spec],
                out_specs=act_spec),
            compiler_params=cparams,
        )(skip_t)

    # Back to NCHW to match the PyTorch output convention.
    out_nchw = out_t.reshape(Cout, N, H, W).transpose(1, 0, 2, 3)
    if skip:
        skip_nchw = skip_t.reshape(Cout, N, H, W).transpose(1, 0, 2, 3)
        return out_nchw, skip_nchw
    return out_nchw


# TODO(synk): PyTorch training-mode BatchNorm2d also updates running_mean /
# running_var as a module side effect; only the output tensors are reproduced.


if __name__ == "__main__":
    # Small shapes consistent with the module: batch=2, in_ch=4, out_ch=8,
    # spatial 16x16, kernel_size=3.
    N, Cin, Cout, H, W, K = 2, 4, 8, 16, 16, 3

    key = jax.random.PRNGKey(0)
    kx, kw, ko = jax.random.split(key, 3)

    x = jax.random.normal(kx, (N, Cin, H, W), dtype=jnp.float32)          # NCHW
    weight = jax.random.normal(kw, (Cout, Cin, K, K), dtype=jnp.float32) * (
        1.0 / jnp.sqrt(Cin * K * K))                                      # OIHW
    gamma = jnp.ones((Cout,), jnp.float32)                                # BN defaults
    beta = jnp.zeros((Cout,), jnp.float32)
    oldskip = jax.random.normal(ko, (N, Cout, H, W), dtype=jnp.float32)

    # Path 1: no oldskip (specialized kernel), use_bn=True, skip=True.
    fwd1 = jax.jit(functools.partial(conv_block_forward, use_bn=True, skip=True))
    out, skip_out = fwd1(x, weight, gamma, beta)

    # Path 2: with oldskip (aliased accumulate), use_bn=True, skip=False.
    fwd2 = jax.jit(functools.partial(conv_block_forward, use_bn=True, skip=False))
    out2 = fwd2(x, weight, gamma, beta, oldskip)

    jax.block_until_ready((out, skip_out, out2))
    assert out.shape == (N, Cout, H, W)
    assert skip_out.shape == (N, Cout, H, W)
    assert out2.shape == (N, Cout, H, W)

    # Loose sanity check vs a pure-JAX reference (kernel uses bf16 MXU operands).
    def reference(x, w, gamma, beta, oldskip, use_bn, eps=1e-5):
        s = jax.lax.conv_general_dilated(
            x, w, window_strides=(1, 1), padding="SAME",
            dimension_numbers=("NCHW", "OIHW", "NCHW"))
        if oldskip is not None:
            s = s + oldskip
        y = jnp.maximum(s, 0.0)
        if use_bn:
            mean = jnp.mean(y, axis=(0, 2, 3), keepdims=True)
            var = jnp.mean((y - mean) ** 2, axis=(0, 2, 3), keepdims=True)
            y = ((y - mean) * jax.lax.rsqrt(var + eps)
                 * gamma.reshape(1, -1, 1, 1) + beta.reshape(1, -1, 1, 1))
        return y, s

    ref_out, ref_skip = reference(x, weight, gamma, beta, None, True)
    ref_out2, _ = reference(x, weight, gamma, beta, oldskip, True)
    assert float(jnp.max(jnp.abs(out - ref_out))) < 0.1
    assert float(jnp.max(jnp.abs(skip_out - ref_skip))) < 0.1
    assert float(jnp.max(jnp.abs(out2 - ref_out2))) < 0.1

    print("KERNEL_OK")
</pallas_src>

<mosaic_0001>
module attributes {stable_mosaic.version = 11 : i64} {
  func.func @_conv_skip_stats_kernel(%arg0: i32, %arg1: memref<8x48xbf16, #tpu.memory_space<vmem>>, %arg2: memref<48x256xbf16, #tpu.memory_space<vmem>>, %arg3: memref<8x256xf32, #tpu.memory_space<vmem>>, %arg4: memref<1x8x2xf32, #tpu.memory_space<vmem>>) attributes {dimension_semantics = [#tpu.dimension_semantics<parallel>], iteration_bounds = array<i64: 2>, scalar_prefetch = 0 : i64, scratch_operands = 0 : i64, tpu.core_type = #tpu.core_type<tc>, window_params = [{pipeline_mode = #tpu.pipeline_mode<synchronous>, transform_indices = @transform_0, window_bounds = array<i64: 8, 48>}, {transform_indices = @transform_1, window_bounds = array<i64: 48, 256>}, {transform_indices = @transform_2, window_bounds = array<i64: 8, 256>}, {transform_indices = @transform_3, window_bounds = array<i64: 1, 8, 2>}]} {
    %c0 = arith.constant 0 : index
    %c0_0 = arith.constant 0 : index
    %0 = vector.load %arg1[%c0, %c0_0] : memref<8x48xbf16, #tpu.memory_space<vmem>>, vector<8x48xbf16>
    %c0_1 = arith.constant 0 : index
    %c0_2 = arith.constant 0 : index
    %1 = vector.load %arg2[%c0_1, %c0_2] : memref<48x256xbf16, #tpu.memory_space<vmem>>, vector<48x256xbf16>
    %cst = arith.constant dense<0.000000e+00> : vector<8x256xf32>
    %2 = tpu.matmul %0, %1, %cst {dimension_numbers = #tpu.dot_dimension_numbers<[1], [0], [0], [1], [0, 0, 1, 1], [], []>} : vector<8x48xbf16>, vector<48x256xbf16>, vector<8x256xf32> -> vector<8x256xf32>
    %c0_3 = arith.constant 0 : index
    %c0_4 = arith.constant 0 : index
    %3 = vector.load %arg3[%c0_3, %c0_4] : memref<8x256xf32, #tpu.memory_space<vmem>>, vector<8x256xf32>
    tpu.vector_store %arg3[%c0_3, %c0_4], %2 {strides = array<i32>} : memref<8x256xf32, #tpu.memory_space<vmem>>, vector<8x256xf32>,
    %cst_5 = arith.constant 0.000000e+00 : f32
    %4 = vector.broadcast %cst_5 : f32 to vector<8x256xf32>
    %5 = arith.maximumf %2, %4 : vector<8x256xf32>
    %cst_6 = arith.constant dense<0.000000e+00> : vector<8xf32>
    %6 = vector.multi_reduction <add>, %5, %cst_6 [1] : vector<8x256xf32> to vector<8xf32>
    %7 = vector.shape_cast %6 : vector<8xf32> to vector<8x1xf32>
    %8 = arith.mulf %5, %5 : vector<8x256xf32>
    %cst_7 = arith.constant dense<0.000000e+00> : vector<8xf32>
    %9 = vector.multi_reduction <add>, %8, %cst_7 [1] : vector<8x256xf32> to vector<8xf32>
    %10 = vector.shape_cast %9 : vector<8xf32> to vector<8x1xf32>
    %11 = tpu.iota {dimensions = array<i32: 1>} : vector<8x2xi32>
    %c0_i32 = arith.constant 0 : i32
    %12 = vector.broadcast %c0_i32 : i32 to vector<8x2xi32>
    %13 = arith.cmpi eq, %11, %12 : vector<8x2xi32>
    %14 = vector.shape_cast %7 : vector<8x1xf32> to vector<8x1xf32>
    %15 = vector.broadcast %14 : vector<8x1xf32> to vector<8x2xf32>
    %16 = vector.shape_cast %10 : vector<8x1xf32> to vector<8x1xf32>
    %17 = vector.broadcast %16 : vector<8x1xf32> to vector<8x2xf32>
    %18 = arith.select %13, %15, %17 : vector<8x2xi1>, vector<8x2xf32>
    %19 = vector.shape_cast %18 : vector<8x2xf32> to vector<1x8x2xf32>
    %c0_8 = arith.constant 0 : index
    %c0_9 = arith.constant 0 : index
    %c0_10 = arith.constant 0 : index
    %20 = vector.load %arg4[%c0_8, %c0_9, %c0_10] : memref<1x8x2xf32, #tpu.memory_space<vmem>>, vector<1x8x2xf32>
    tpu.vector_store %arg4[%c0_8, %c0_9, %c0_10], %19 {strides = array<i32>} : memref<1x8x2xf32, #tpu.memory_space<vmem>>, vector<1x8x2xf32>,
    return
  }
  func.func @transform_0(%arg0: i32) -> (i32, i32) {
    %c0_i32 = arith.constant 0 : i32
    %c0_i32_0 = arith.constant 0 : i32
    %c0_i32_1 = arith.constant 0 : i32
    return %c0_i32, %c0_i32_0 : i32, i32
  }
  func.func @transform_1(%arg0: i32) -> (i32, i32) {
    %c0_i32 = arith.constant 0 : i32
    %c0_i32_0 = arith.constant 0 : i32
    return %c0_i32, %arg0 : i32, i32
  }
  func.func @transform_2(%arg0: i32) -> (i32, i32) {
    %c0_i32 = arith.constant 0 : i32
    %c0_i32_0 = arith.constant 0 : i32
    return %c0_i32, %arg0 : i32, i32
  }
  func.func @transform_3(%arg0: i32) -> (i32, i32, i32) {
    %c0_i32 = arith.constant 0 : i32
    %c0_i32_0 = arith.constant 0 : i32
    %c0_i32_1 = arith.constant 0 : i32
    return %arg0, %c0_i32, %c0_i32_0 : i32, i32, i32
  }
}

module attributes {stable_mosaic.version = 11 : i64} {
  func.func @_bn_relu_kernel(%arg0: i32, %arg1: memref<2x8x2xf32, #tpu.memory_space<vmem>>, %arg2: memref<8x1xf32, #tpu.memory_space<vmem>>, %arg3: memref<8x1xf32, #tpu.memory_space<vmem>>, %arg4: memref<8x256xf32, #tpu.memory_space<vmem>>, %arg5: memref<8x256xf32, #tpu.memory_space<vmem>>) attributes {dimension_semantics = [#tpu.dimension_semantics<parallel>], iteration_bounds = array<i64: 2>, scalar_prefetch = 0 : i64, scratch_operands = 0 : i64, tpu.core_type = #tpu.core_type<tc>, window_params = [{pipeline_mode = #tpu.pipeline_mode<synchronous>, transform_indices = @transform_0, window_bounds = array<i64: 2, 8, 2>}, {pipeline_mode = #tpu.pipeline_mode<synchronous>, transform_indices = @transform_1, window_bounds = array<i64: 8, 1>}, {pipeline_mode = #tpu.pipeline_mode<synchronous>, transform_indices = @transform_2, window_bounds = array<i64: 8, 1>}, {transform_indices = @transform_3, window_bounds = array<i64: 8, 256>}, {transform_indices = @transform_4, window_bounds = array<i64: 8, 256>}]} {
    %c0 = arith.constant 0 : index
    %c0_0 = arith.constant 0 : index
    %c0_1 = arith.constant 0 : index
    %0 = vector.load %arg1[%c0, %c0_0, %c0_1] : memref<2x8x2xf32, #tpu.memory_space<vmem>>, vector<2x8x2xf32>
    %cst = arith.constant dense<0.000000e+00> : vector<8x2xf32>
    %1 = vector.multi_reduction <add>, %0, %cst [0] : vector<2x8x2xf32> to vector<8x2xf32>
    %2 = vector.extract_strided_slice %1 {offsets = [0, 0], sizes = [8, 1], strides = [1, 1]} : vector<8x2xf32> to vector<8x1xf32>
    %cst_2 = arith.constant 0.001953125 : f32
    %3 = vector.broadcast %cst_2 : f32 to vector<8x1xf32>
    %4 = arith.mulf %2, %3 : vector<8x1xf32>
    %5 = vector.extract_strided_slice %1 {offsets = [0, 1], sizes = [8, 1], strides = [1, 1]} : vector<8x2xf32> to vector<8x1xf32>
    %cst_3 = arith.constant 0.001953125 : f32
    %6 = vector.broadcast %cst_3 : f32 to vector<8x1xf32>
    %7 = arith.mulf %5, %6 : vector<8x1xf32>
    %8 = arith.mulf %4, %4 : vector<8x1xf32>
    %9 = arith.subf %7, %8 : vector<8x1xf32>
    %cst_4 = arith.constant 9.99999974E-6 : f32
    %10 = vector.broadcast %cst_4 : f32 to vector<8x1xf32>
    %11 = arith.addf %9, %10 : vector<8x1xf32>
    %12 = math.rsqrt %11 : vector<8x1xf32>
    %c0_5 = arith.constant 0 : index
    %c0_6 = arith.constant 0 : index
    %13 = vector.load %arg2[%c0_5, %c0_6] : memref<8x1xf32, #tpu.memory_space<vmem>>, vector<8x1xf32>
    %14 = arith.mulf %13, %12 : vector<8x1xf32>
    %c0_7 = arith.constant 0 : index
    %c0_8 = arith.constant 0 : index
    %15 = vector.load %arg3[%c0_7, %c0_8] : memref<8x1xf32, #tpu.memory_space<vmem>>, vector<8x1xf32>
    %16 = arith.mulf %4, %14 : vector<8x1xf32>
    %17 = arith.subf %15, %16 : vector<8x1xf32>
    %c0_9 = arith.constant 0 : index
    %c0_10 = arith.constant 0 : index
    %18 = vector.load %arg4[%c0_9, %c0_10] : memref<8x256xf32, #tpu.memory_space<vmem>>, vector<8x256xf32>
    %cst_11 = arith.constant 0.000000e+00 : f32
    %19 = vector.broadcast %cst_11 : f32 to vector<8x256xf32>
    %20 = arith.maximumf %18, %19 : vector<8x256xf32>
    %21 = vector.broadcast %14 : vector<8x1xf32> to vector<8x256xf32>
    %22 = arith.mulf %20, %21 : vector<8x256xf32>
    %23 = vector.broadcast %17 : vector<8x1xf32> to vector<8x256xf32>
    %24 = arith.addf %22, %23 : vector<8x256xf32>
    %c0_12 = arith.constant 0 : index
    %c0_13 = arith.constant 0 : index
    %25 = vector.load %arg5[%c0_12, %c0_13] : memref<8x256xf32, #tpu.memory_space<vmem>>, vector<8x256xf32>
    tpu.vector_store %arg5[%c0_12, %c0_13], %24 {strides = array<i32>} : memref<8x256xf32, #tpu.memory_space<vmem>>, vector<8x256xf32>,
    return
  }
  func.func @transform_0(%arg0: i32) -> (i32, i32, i32) {
    %c0_i32 = arith.constant 0 : i32
    %c0_i32_0 = arith.constant 0 : i32
    %c0_i32_1 = arith.constant 0 : i32
    %c0_i32_2 = arith.constant 0 : i32
    return %c0_i32, %c0_i32_0, %c0_i32_1 : i32, i32, i32
  }
  func.func @transform_1(%arg0: i32) -> (i32, i32) {
    %c0_i32 = arith.constant 0 : i32
    %c0_i32_0 = arith.constant 0 : i32
    %c0_i32_1 = arith.constant 0 : i32
    return %c0_i32, %c0_i32_0 : i32, i32
  }
  func.func @transform_2(%arg0: i32) -> (i32, i32) {
    %c0_i32 = arith.constant 0 : i32
    %c0_i32_0 = arith.constant 0 : i32
    %c0_i32_1 = arith.constant 0 : i32
    return %c0_i32, %c0_i32_0 : i32, i32
  }
  func.func @transform_3(%arg0: i32) -> (i32, i32) {
    %c0_i32 = arith.constant 0 : i32
    %c0_i32_0 = arith.constant 0 : i32
    return %c0_i32, %arg0 : i32, i32
  }
  func.func @transform_4(%arg0: i32) -> (i32, i32) {
    %c0_i32 = arith.constant 0 : i32
    %c0_i32_0 = arith.constant 0 : i32
    return %c0_i32, %arg0 : i32, i32
  }
}

</mosaic_0001>

<llo_original>
// kernel: conv_block_forward.2
$region0: #{conv_block_forward.2}
  #allocation0 [shape = 'u32[]', space=smem, size = 0x4, offset = 0x4, fixed_abs, tag = 'smem constant byte address 0x4 - core index']
  #allocation1 [shape = 'u32[144,128]{1,0:T(1,128)}', space=vmem, size = 0x12000, scoped, tag = 'internal scratch']
  %s0 = inlined_call_operand.vmem [shape: bf16[8,48], index: 0, kind: input, shape index: {}]
  %s1 = inlined_call_operand.vmem [shape: bf16[48,512], index: 1, kind: input, shape index: {}]
  %s2 = inlined_call_operand.vmem [shape: f32[8,512], index: 2, kind: output, shape index: {0}]
  %s3 = inlined_call_operand.vmem [shape: f32[2,8,2], index: 3, kind: output, shape index: {1}]
  %4 = xla_tuple %s2, %s3
  %s5 = sld [smem:[#allocation0]]
  $region87: #{conv_block_forward.2} parent=0
    _
  %s7 = ssub.s32 1, %s5
  %s8 = scalar_select 0, %s7, %s5
  $region1: #{conv_block_forward.2} parent=0
    #allocation2 [shape = 'u8[49152]{0}', space=vmem, size = 0xc000, scoped, tag = 'input window, operand 1']
    loop: start=0, step=1, limit=4
    $region2: #{conv_block_forward.2} parent=1 // loop_pre_header
      _
    $region3: #{conv_block_forward.2} parent=1 // loop_header
      %s10 = sphi 0, %s14
      %p11 = scmp.ge.s32.totalorder %s10, 4
      %s18 = sphi 0, %s18
      %s20 = sphi 0, %s18
      %s21 = sphi 0, %s20
      %s35 = sphi 0, %s21
      %s41 = sphi 0, %s43
      %s44 = sphi 0, %s41
      %s45 = sphi 0, %s44
      %s61 = sphi 0, %s45
      %s67 = sphi 0, %s69
      %s70 = sphi 0, %s67
      %s71 = sphi 0, %s70
      %s87 = sphi 0, %s71
      %s93 = sphi 0, %s95
      %s96 = sphi 0, %s93
      %s97 = sphi 0, %s96
      %s113 = sphi 0, %s97
    $region4: #{conv_block_forward.2} parent=1 // loop_header_branch
      %13 = sbr.rel (%p11) target = $region8
    $region5: #{conv_block_forward.2} parent=1 // loop_body
      %s15 = ssub.s32 %s10, 1
      %s16 = ssub.s32 %s10, 2
      %s17 = sadd.s32 %s10, 1
      %s19 = sadd.s32 %s18, 1
      %p22 = scmp.eq.s32.totalorder %s10, 1
      %p23 = scmp.ne.s32.totalorder %s18, %s20
      %p24 = scmp.eq.s32.totalorder %s10, 0
      %p25 = por %p23, %p24
      %p26 = scmp.ne.s32.totalorder %s18, %s20
      %p27 = scmp.eq.s32.totalorder %s15, 1
      %p28 = por %p26, %p27
      %p29 = scmp.ne.s32.totalorder %s20, %s21
      %p30 = scmp.eq.s32.totalorder %s15, 0
      %p31 = por %p29, %p30
      %p32 = scmp.ne.s32.totalorder %s20, %s21
      %p33 = scmp.eq.s32.totalorder %s16, 1
      %p34 = por %p32, %p33
      %p36 = scmp.ne.s32.totalorder %s21, %s35
      %p37 = scmp.eq.s32.totalorder %s16, 0
      %p38 = por %p36, %p37
      %s39 = ssub.s32 %s10, %s17
      %p40 = scmp.eq.s32.totalorder %s39, 0
      %s42 = sadd.s32 %s41, 1
      %s43 = scalar_select %p40, %s41, %s42
      %p46 = pneg %p40
      %p47 = scmp.eq.s32.totalorder %s10, 1
      %p48 = por %p46, %p47
      %p49 = scmp.ne.s32.totalorder %s41, %s44
      %p50 = scmp.eq.s32.totalorder %s10, 0
      %p51 = por %p49, %p50
      %p52 = scmp.ne.s32.totalorder %s41, %s44
      %p53 = scmp.eq.s32.totalorder %s15, 1
      %p54 = por %p52, %p53
      %p55 = scmp.ne.s32.totalorder %s44, %s45
      %p56 = scmp.eq.s32.totalorder %s15, 0
      %p57 = por %p55, %p56
      %p58 = scmp.ne.s32.totalorder %s44, %s45
      %p59 = scmp.eq.s32.totalorder %s16, 1
      %p60 = por %p58, %p59
      %p62 = scmp.ne.s32.totalorder %s45, %s61
      %p63 = scmp.eq.s32.totalorder %s16, 0
      %p64 = por %p62, %p63
      %s65 = ssub.s32 %s10, %s17
      %p66 = scmp.eq.s32.totalorder %s65, 0
      %s68 = sadd.s32 %s67, 1
      %s69 = scalar_select %p66, %s67, %s68
      %p72 = pneg %p66
      %p73 = scmp.eq.s32.totalorder %s10, 1
      %p74 = por %p72, %p73
      %p75 = scmp.ne.s32.totalorder %s67, %s70
      %p76 = scmp.eq.s32.totalorder %s10, 0
      %p77 = por %p75, %p76
      %p78 = scmp.ne.s32.totalorder %s67, %s70
      %p79 = scmp.eq.s32.totalorder %s15, 1
      %p80 = por %p78, %p79
      %p81 = scmp.ne.s32.totalorder %s70, %s71
      %p82 = scmp.eq.s32.totalorder %s15, 0
      %p83 = por %p81, %p82
      %p84 = scmp.ne.s32.totalorder %s70, %s71
      %p85 = scmp.eq.s32.totalorder %s16, 1
      %p86 = por %p84, %p85
      %p88 = scmp.ne.s32.totalorder %s71, %s87
      %p89 = scmp.eq.s32.totalorder %s16, 0
      %p90 = por %p88, %p89
      %s91 = ssub.s32 %s10, %s17
      %p92 = scmp.eq.s32.totalorder %s91, 0
      %s94 = sadd.s32 %s93, 1
      %s95 = scalar_select %p92, %s93, %s94
      %p98 = pneg %p92
      %p99 = scmp.eq.s32.totalorder %s10, 1
      %p100 = por %p98, %p99
      %p101 = scmp.ne.s32.totalorder %s93, %s96
      %p102 = scmp.eq.s32.totalorder %s10, 0
      %p103 = por %p101, %p102
      %p104 = scmp.ne.s32.totalorder %s93, %s96
      %p105 = scmp.eq.s32.totalorder %s15, 1
      %p106 = por %p104, %p105
      %p107 = scmp.ne.s32.totalorder %s96, %s97
      %p108 = scmp.eq.s32.totalorder %s15, 0
      %p109 = por %p107, %p108
      %p110 = scmp.ne.s32.totalorder %s96, %s97
      %p111 = scmp.eq.s32.totalorder %s16, 1
      %p112 = por %p110, %p111
      %p114 = scmp.ne.s32.totalorder %s97, %s113
      %p115 = scmp.eq.s32.totalorder %s16, 0
      %p116 = por %p114, %p115
      %p117 = scmp.le.s32.totalorder 1, %s10
      %p118 = scmp.lt.s32.totalorder %s10, 3
      %p119 = pnand %p117, %p118
      %p120 = pneg %p119
      // Predicated region
      $region9: #{conv_block_forward.2} parent=5 // pred_check
        _
      $region10: #{conv_block_forward.2} parent=5 // pred_check_branch
        %122 = sbr.rel (%p119) target = $region12
      $region11: #{conv_block_forward.2} parent=5 // pred_region
        %s123 = ssub.s32 %s10, 1
        // Predicated region
        $region13: #{conv_block_forward.2} parent=11 // pred_check
          %p124 = pneg %p31
        $region14: #{conv_block_forward.2} parent=11 // pred_check_branch
          %126 = sbr.rel (%p124) target = $region16
        $region15: #{conv_block_forward.2} parent=11 // pred_region
          _
        $region16: #{conv_block_forward.2} parent=11 // pred_fallthru
          _
      $region12: #{conv_block_forward.2} parent=5 // pred_fallthru
        _
      %p127 = scmp.lt.s32.totalorder %s10, 2
      // Predicated region
      $region17: #{conv_block_forward.2} parent=5 // pred_check
        %p128 = pneg %p127
      $region18: #{conv_block_forward.2} parent=5 // pred_check_branch
        %130 = sbr.rel (%p128) target = $region20
      $region19: #{conv_block_forward.2} parent=5 // pred_region
        // Predicated region
        $region21: #{conv_block_forward.2} parent=19 // pred_check
          %p131 = pneg %p51
        $region22: #{conv_block_forward.2} parent=19 // pred_check_branch
          %133 = sbr.rel (%p131) target = $region24
        $region23: #{conv_block_forward.2} parent=19 // pred_region
          %s134 = sand.u32 %s41, 1
          %s135 = sand.u32 %s41, 1
          %s136 = smul.addr %s135, 48
          %s137 = scalar_lea.vmem [#allocation2], %s136
          %s138 = smul.u32 2, %s10
          %s139 = smul.addr %s138, 4
          %s140 = scalar_lea.vmem %s1, %s139
          // Predicated region
          $region25: #{conv_block_forward.2} parent=23 // pred_check
            _
          $region26: #{conv_block_forward.2} parent=23 // pred_check_branch
            %142 = sbr.rel (0) target = $region28
          $region27: #{conv_block_forward.2} parent=23 // pred_region
            // Predicated region
            $region29: #{conv_block_forward.2} parent=27 // pred_check
              _
            $region30: #{conv_block_forward.2} parent=27 // pred_check_branch
              %144 = sbr.rel (0) target = $region32
            $region31: #{conv_block_forward.2} parent=27 // pred_region
              // Predicated region
              $region44: #{conv_block_forward.2} parent=31 // pred_check
                _
              $region45: #{conv_block_forward.2} parent=31 // pred_check_branch
                %170 = sbr.rel (0) target = $region47
              $region46: #{conv_block_forward.2} parent=31 // pred_region
                loop: start=0, step=1, limit=1
                $region48: #{conv_block_forward.2} parent=46 // loop_pre_header
                  _
                $region49: #{conv_block_forward.2} parent=46 // loop_header
                  %s172 = sphi 0, %s176
                  %p173 = scmp.ge.s32.totalorder %s172, 1
                  %s177 = sphi %s140, %s140
                  %s178 = sphi %s137, %s137
                $region50: #{conv_block_forward.2} parent=46 // loop_header_branch
                  %175 = sbr.rel (%p173) target = $region54
                $region51: #{conv_block_forward.2} parent=46 // loop_body
                  %v179 = vld [vmem:[%s177] sm:$0xff]
                  %180 = vst [vmem:[%s178] sm:$0xff] %v179
                  %v181 = vld [vmem:[%s177 + $0x10] sm:$0xff]
                  %182 = vst [vmem:[%s178 + $0x8] sm:$0xff] %v181
                  %v183 = vld [vmem:[%s177 + $0x20] sm:$0xff]
                  %184 = vst [vmem:[%s178 + $0x10] sm:$0xff] %v183
                  %v185 = vld [vmem:[%s177 + $0x30] sm:$0xff]
                  %186 = vst [vmem:[%s178 + $0x18] sm:$0xff] %v185
                  %v187 = vld [vmem:[%s177 + $0x40] sm:$0xff]
                  %188 = vst [vmem:[%s178 + $0x20] sm:$0xff] %v187
                  %v189 = vld [vmem:[%s177 + $0x50] sm:$0xff]
                  %190 = vst [vmem:[%s178 + $0x28] sm:$0xff] %v189
                $region52: #{conv_block_forward.2} parent=46 // loop_footer
                  %s176 = sadd.s32 1, %s172
                $region53: #{conv_block_forward.2} parent=46 // loop_footer_branch
                  %171 = sbr.rel target = $region49
                $region54: #{conv_block_forward.2} parent=46 // loop_exit
                  _
              $region47: #{conv_block_forward.2} parent=31 // pred_fallthru
                _
              // Predicated region
              $region55: #{conv_block_forward.2} parent=31 // pred_check
                _
              $region56: #{conv_block_forward.2} parent=31 // pred_check_branch
                %192 = sbr.rel target = $region58
              $region57: #{conv_block_forward.2} parent=31 // pred_region
                _
              $region58: #{conv_block_forward.2} parent=31 // pred_fallthru
                _
            $region32: #{conv_block_forward.2} parent=27 // pred_fallthru
              _
            // Predicated region
            $region33: #{conv_block_forward.2} parent=27 // pred_check
              _
            $region34: #{conv_block_forward.2} parent=27 // pred_check_branch
              %146 = sbr.rel target = $region36
            $region35: #{conv_block_forward.2} parent=27 // pred_region
              %s148 = ssub.s32 256, 1
              loop: start=0, step=1, limit=1
              $region37: #{conv_block_forward.2} parent=35 // loop_pre_header
                _
              $region38: #{conv_block_forward.2} parent=35 // loop_header
                %s150 = sphi 0, %s154
                %p151 = scmp.ge.s32.totalorder %s150, 1
                %s155 = sphi %s140, %s140
                %s156 = sphi %s137, %s137
              $region39: #{conv_block_forward.2} parent=35 // loop_header_branch
                %153 = sbr.rel (%p151) target = $region43
              $region40: #{conv_block_forward.2} parent=35 // loop_body
                %v157 = vld [vmem:[%s155] sm:%s148]
                %158 = vst [vmem:[%s156] sm:%s148] %v157
                %v159 = vld [vmem:[%s155 + $0x10] sm:%s148]
                %160 = vst [vmem:[%s156 + $0x8] sm:%s148] %v159
                %v161 = vld [vmem:[%s155 + $0x20] sm:%s148]
                %162 = vst [vmem:[%s156 + $0x10] sm:%s148] %v161
                %v163 = vld [vmem:[%s155 + $0x30] sm:%s148]
                %164 = vst [vmem:[%s156 + $0x18] sm:%s148] %v163
                %v165 = vld [vmem:[%s155 + $0x40] sm:%s148]
                %166 = vst [vmem:[%s156 + $0x20] sm:%s148] %v165
                %v167 = vld [vmem:[%s155 + $0x50] sm:%s148]
                %168 = vst [vmem:[%s156 + $0x28] sm:%s148] %v167
              $region41: #{conv_block_forward.2} parent=35 // loop_footer
                %s154 = sadd.s32 1, %s150
              $region42: #{conv_block_forward.2} parent=35 // loop_footer_branch
                %149 = sbr.rel target = $region38
              $region43: #{conv_block_forward.2} parent=35 // loop_exit
                _
            $region36: #{conv_block_forward.2} parent=27 // pred_fallthru
              _
          $region28: #{conv_block_forward.2} parent=23 // pred_fallthru
            _
          %193 = vnop
        $region24: #{conv_block_forward.2} parent=19 // pred_fallthru
          _
      $region20: #{conv_block_forward.2} parent=5 // pred_fallthru
        _
      %p194 = scmp.le.s32.totalorder 1, %s10
      %p195 = scmp.lt.s32.totalorder %s10, 3
      %p196 = pnand %p194, %p195
      %p197 = pneg %p196
      // Predicated region
      $region59: #{conv_block_forward.2} parent=5 // pred_check
        _
      $region60: #{conv_block_forward.2} parent=5 // pred_check_branch
        %199 = sbr.rel (%p196) target = $region62
      $region61: #{conv_block_forward.2} parent=5 // pred_region
        %s200 = ssub.s32 %s10, 1
        %s201 = sand.u32 %s44, 1
        %s202 = sand.u32 %s44, 1
        %s203 = smul.addr %s202, 48
        %s204 = scalar_lea.vmem [#allocation2], %s203
        // Predicated region
        $region63: #{conv_block_forward.2} parent=61 // pred_check
          %p205 = pneg %p57
        $region64: #{conv_block_forward.2} parent=61 // pred_check_branch
          %207 = sbr.rel (%p205) target = $region66
        $region65: #{conv_block_forward.2} parent=61 // pred_region
          _
        $region66: #{conv_block_forward.2} parent=61 // pred_fallthru
          _
        %p208 = pneg %p31
        %p209 = pneg %p28
        %s210 = sand.u32 %s44, 1
        %s211 = sand.u32 %s44, 1
        %s212 = smul.addr %s211, 48
        %s213 = scalar_lea.vmem [#allocation2], %s212
        %p214 = pneg %p57
        %p215 = pneg %p54
        %p216 = pneg %p83
        %p217 = pneg %p80
        %s218 = smul.u32 2, %s15
        %p219 = scmp.lt.s32.totalorder %s218, 3
        %s220 = scalar_select %p219, %s218, 3
        %s221 = smul.addr %s220, 8
        %s222 = scalar_lea.vmem %s2, %s221
        %p223 = pneg %p109
        %p224 = pneg %p106
        %p225 = scmp.lt.s32.totalorder %s15, 1
        %s226 = scalar_select %p225, %s15, 1
        %s227 = smul.addr %s226, 8
        %s228 = scalar_lea.vmem %s3, %s227
        %s229 = smul.u32 2, %s15
        %s230 = smul.u32 2, %s15
        %p231 = scmp.lt.s32.totalorder %s230, 3
        %s232 = scalar_select %p231, %s230, 3
        %s233 = smul.addr %s232, 8
        %s234 = scalar_lea.vmem %s2, %s233
        %s235 = smul.u32 2, %s15
        %p236 = scmp.lt.s32.totalorder %s15, 1
        %s237 = scalar_select %p236, %s15, 1
        %s238 = smul.addr %s237, 8
        %s239 = scalar_lea.vmem %s3, %s238
        %v241 = vld [vmem:[%s0] sm:$0xf]
        %v242 = vld [vmem:[%s204] sm:$0xff]
        %v243 = vld [vmem:[%s204 + $0x8] sm:$0xff]
        %v244 = vld [vmem:[%s204 + $0x10] sm:$0xff]
        %v245 = vld [vmem:[%s204 + $0x18] sm:$0xff]
        %v246 = vld [vmem:[%s204 + $0x20] sm:$0xff]
        %v247 = vld [vmem:[%s204 + $0x28] sm:$0xff]
        %v254 = vunpack.c.l.b16 %v242
        %v255 = vunpack.c.h.b16 %v242
        %v256 = vunpack.c.l.b16 %v243
        %v257 = vunpack.c.h.b16 %v243
        %v258 = vunpack.c.l.b16 %v244
        %v259 = vunpack.c.h.b16 %v244
        %v260 = vunpack.c.l.b16 %v245
        %v261 = vunpack.c.h.b16 %v245
        %v262 = vunpack.c.l.b16 %v246
        %v263 = vunpack.c.h.b16 %v246
        %v264 = vunpack.c.l.b16 %v247
        %v265 = vunpack.c.h.b16 %v247
        %v266 = vpack.c.b16 %v256, %v254
        %v267 = vpack.c.b16 %v257, %v255
        %v268 = vpack.c.b16 %v260, %v258
        %v269 = vpack.c.b16 %v261, %v259
        %v270 = vpack.c.b16 %v264, %v262
        %v271 = vpack.c.b16 %v265, %v263
        %vm278 = vcmask 392192
        %v280 = vsel %vm278, %v241, 0
        %282 = vmatprep.subr.bf16.mxu0 0
        %283 = vmatpush1.bf16.msra.mxu0 0
        %284 = vmatprep.subr.bf16.mxu0 0
        %285 = vmatpush1.bf16.msra.mxu0 0
        %286 = vmatprep.subr.bf16.mxu0 0
        %287 = vmatpush1.bf16.msra.mxu0 0
        %288 = vmatprep.subr.bf16.mxu0 0
        %289 = vmatpush1.bf16.msra.mxu0 0
        %290 = vmatprep.subr.bf16.mxu0 0
        %291 = vmatpush1.bf16.msra.mxu0 0
        %292 = vmatprep.subr.bf16.mxu0 %v271
        %293 = vmatpush1.bf16.msra.mxu0 %v270
        %294 = vmatprep.subr.bf16.mxu0 %v269
        %295 = vmatpush1.bf16.msra.mxu0 %v268
        %296 = vmatprep.subr.bf16.mxu0 %v267
        %297 = vmatpush1.bf16.msra.mxu0 %v266
        %298 = vmatprep.subr.bf16.mxu0 0
        %299 = vmatpush2.bf16.msra.mxu0 0
        %300 = vmatprep.subr.bf16.mxu0 0
        %301 = vmatpush2.bf16.msra.mxu0 0
        %302 = vmatprep.subr.bf16.mxu0 0
        %303 = vmatpush2.bf16.msra.mxu0 0
        %304 = vmatprep.subr.bf16.mxu0 0
        %305 = vmatpush2.bf16.msra.mxu0 0
        %306 = vmatprep.subr.bf16.mxu0 0
        %307 = vmatpush2.bf16.msra.mxu0 0
        %308 = vmatprep.subr.bf16.mxu0 0
        %309 = vmatpush2.bf16.msra.mxu0 0
        %310 = vmatprep.subr.bf16.mxu0 0
        %311 = vmatpush2.bf16.msra.mxu0 0
        %312 = vmatprep.subr.bf16.mxu0 0
        %313 = vmatpush2.bf16.msra.mxu0 0
        %314 = vmatprep.mubr.bf16.mxu0 0
        %315 = vmatmul.mubr.bf16.gmra.mxu0 %v280
        %v316 = vpop.f32.mrf.mxu0
        %v317 = vadd.f32 0.0, %v316
        %v318 = vpop.f32.mrf.mxu0
        %v319 = vadd.f32 0.0, %v318
        %v320 = vpop.f32.mrf.mxu0
        %v321 = vpop.f32.mrf.mxu0
        %322 = vdwg.mxu0
        %323 = vst [vmem:[%s234] sm:$0xff] %v317
        %324 = vst [vmem:[%s234 + $0x8] sm:$0xff] %v319
        %v325 = vmax.f32 %v317, 0.0
        %v326 = vmax.f32 %v319, 0.0
        %v327 = vadd.f32 %v325, %v326
        %328 = vadd.xlane.f32.xlu0 %v327
        %v329 = vpop.xlane.xlu0 %328
        %v330 = vmul.f32 %v325, %v325
        %v331 = vmul.f32 %v326, %v326
        %v332 = vadd.f32 %v330, %v331
        %333 = vadd.xlane.f32.xlu0 %v332
        %v334 = vpop.xlane.xlu0 %333
        %v335 = vlaneseq
        %v336 = vand.u32 %v335, 127
        %vm337 = vcmp.eq.s32.totalorder %v336, 0
        %v338 = vsel %vm337, %v329, %v334
        %vm339 = vcmask 15360
        %340 = vst.msk [vmem:[%s239] sm:$0xff] %vm339, %v338
        %s341 = smul.u32 2, %s15
        %p342 = scmp.lt.s32.totalorder %s341, 3
        %s343 = scalar_select %p342, %s341, 3
        %s344 = smul.addr %s343, 8
        %s345 = scalar_lea.vmem %s2, %s344
        %p346 = scmp.lt.s32.totalorder %s15, 1
        %s347 = scalar_select %p346, %s15, 1
        %s348 = smul.addr %s347, 8
        %s349 = scalar_lea.vmem %s3, %s348
        // Predicated region
        $region67: #{conv_block_forward.2} parent=61 // pred_check
          %p350 = pneg %p80
        $region68: #{conv_block_forward.2} parent=61 // pred_check_branch
          %352 = sbr.rel (%p350) target = $region70
        $region69: #{conv_block_forward.2} parent=61 // pred_region
          %s353 = smul.u32 2, %s15
        $region70: #{conv_block_forward.2} parent=61 // pred_fallthru
          _
        // Predicated region
        $region71: #{conv_block_forward.2} parent=61 // pred_check
          %p354 = pneg %p106
        $region72: #{conv_block_forward.2} parent=61 // pred_check_branch
          %356 = sbr.rel (%p354) target = $region74
        $region73: #{conv_block_forward.2} parent=61 // pred_region
          _
        $region74: #{conv_block_forward.2} parent=61 // pred_fallthru
          _
      $region62: #{conv_block_forward.2} parent=5 // pred_fallthru
        _
      %p357 = scmp.le.s32.totalorder 2, %s10
      // Predicated region
      $region75: #{conv_block_forward.2} parent=5 // pred_check
        %p358 = pneg %p357
      $region76: #{conv_block_forward.2} parent=5 // pred_check_branch
        %360 = sbr.rel (%p358) target = $region78
      $region77: #{conv_block_forward.2} parent=5 // pred_region
        %s361 = ssub.s32 %s10, 2
        // Predicated region
        $region79: #{conv_block_forward.2} parent=77 // pred_check
          %p362 = pneg %p86
        $region80: #{conv_block_forward.2} parent=77 // pred_check_branch
          %364 = sbr.rel (%p362) target = $region82
        $region81: #{conv_block_forward.2} parent=77 // pred_region
          %s365 = smul.u32 2, %s16
          %p366 = scmp.lt.s32.totalorder %s365, 3
          %s367 = scalar_select %p366, %s365, 3
          %s368 = smul.addr %s367, 8
          %s369 = scalar_lea.vmem %s2, %s368
        $region82: #{conv_block_forward.2} parent=77 // pred_fallthru
          _
        // Predicated region
        $region83: #{conv_block_forward.2} parent=77 // pred_check
          %p370 = pneg %p112
        $region84: #{conv_block_forward.2} parent=77 // pred_check_branch
          %372 = sbr.rel (%p370) target = $region86
        $region85: #{conv_block_forward.2} parent=77 // pred_region
          %p373 = scmp.lt.s32.totalorder %s16, 1
          %s374 = scalar_select %p373, %s16, 1
          %s375 = smul.addr %s374, 8
          %s376 = scalar_lea.vmem %s3, %s375
        $region86: #{conv_block_forward.2} parent=77 // pred_fallthru
          _
      $region78: #{conv_block_forward.2} parent=5 // pred_fallthru
        _
    $region6: #{conv_block_forward.2} parent=1 // loop_footer
      %s14 = sadd.s32 1, %s10
    $region7: #{conv_block_forward.2} parent=1 // loop_footer_branch
      %9 = sbr.rel target = $region3
    $region8: #{conv_block_forward.2} parent=1 // loop_exit
      _

// kernel: conv_block_forward.3
$region0: #{conv_block_forward.3}
  #allocation0 [shape = 'u32[]', space=smem, size = 0x4, offset = 0x4, fixed_abs, tag = 'smem constant byte address 0x4 - core index']
  #allocation1 [shape = 'u32[144,128]{1,0:T(1,128)}', space=vmem, size = 0x12000, scoped, tag = 'internal scratch']
  %s0 = inlined_call_operand.vmem [shape: f32[2,8,2], index: 0, kind: input, shape index: {}]
  %s1 = inlined_call_operand.vmem [shape: f32[8,1], index: 1, kind: input, shape index: {}]
  %s2 = inlined_call_operand.vmem [shape: f32[8,1], index: 2, kind: input, shape index: {}]
  %s3 = inlined_call_operand.vmem [shape: f32[8,512], index: 3, kind: input, shape index: {}]
  %s4 = inlined_call_operand.vmem [shape: f32[8,512], index: 4, kind: output, shape index: {}]
  %s5 = sld [smem:[#allocation0]]
  $region49: #{conv_block_forward.3} parent=0
    _
  %s7 = ssub.s32 1, %s5
  %s8 = scalar_select 0, %s7, %s5
  loop: start=0, step=1, limit=4
  $region2: #{conv_block_forward.3} parent=0 // loop_pre_header
    _
  $region3: #{conv_block_forward.3} parent=0 // loop_header
    %s10 = sphi 0, %s14
    %p11 = scmp.ge.s32.totalorder %s10, 4
    %s18 = sphi 0, %s18
    %s20 = sphi 0, %s18
    %s21 = sphi 0, %s20
    %s35 = sphi 0, %s21
    %s39 = sphi 0, %s39
    %s41 = sphi 0, %s39
    %s42 = sphi 0, %s41
    %s56 = sphi 0, %s42
    %s60 = sphi 0, %s60
    %s62 = sphi 0, %s60
    %s63 = sphi 0, %s62
    %s77 = sphi 0, %s63
    %s83 = sphi 0, %s85
    %s86 = sphi 0, %s83
    %s87 = sphi 0, %s86
    %s103 = sphi 0, %s87
    %s109 = sphi 0, %s111
    %s112 = sphi 0, %s109
    %s113 = sphi 0, %s112
    %s129 = sphi 0, %s113
  $region4: #{conv_block_forward.3} parent=0 // loop_header_branch
    %13 = sbr.rel (%p11) target = $region8
  $region5: #{conv_block_forward.3} parent=0 // loop_body
    %s15 = ssub.s32 %s10, 1
    %s16 = ssub.s32 %s10, 2
    %s17 = sadd.s32 %s10, 1
    %s19 = sadd.s32 %s18, 1
    %p22 = scmp.eq.s32.totalorder %s10, 1
    %p23 = scmp.ne.s32.totalorder %s18, %s20
    %p24 = scmp.eq.s32.totalorder %s10, 0
    %p25 = por %p23, %p24
    %p26 = scmp.ne.s32.totalorder %s18, %s20
    %p27 = scmp.eq.s32.totalorder %s15, 1
    %p28 = por %p26, %p27
    %p29 = scmp.ne.s32.totalorder %s20, %s21
    %p30 = scmp.eq.s32.totalorder %s15, 0
    %p31 = por %p29, %p30
    %p32 = scmp.ne.s32.totalorder %s20, %s21
    %p33 = scmp.eq.s32.totalorder %s16, 1
    %p34 = por %p32, %p33
    %p36 = scmp.ne.s32.totalorder %s21, %s35
    %p37 = scmp.eq.s32.totalorder %s16, 0
    %p38 = por %p36, %p37
    %s40 = sadd.s32 %s39, 1
    %p43 = scmp.eq.s32.totalorder %s10, 1
    %p44 = scmp.ne.s32.totalorder %s39, %s41
    %p45 = scmp.eq.s32.totalorder %s10, 0
    %p46 = por %p44, %p45
    %p47 = scmp.ne.s32.totalorder %s39, %s41
    %p48 = scmp.eq.s32.totalorder %s15, 1
    %p49 = por %p47, %p48
    %p50 = scmp.ne.s32.totalorder %s41, %s42
    %p51 = scmp.eq.s32.totalorder %s15, 0
    %p52 = por %p50, %p51
    %p53 = scmp.ne.s32.totalorder %s41, %s42
    %p54 = scmp.eq.s32.totalorder %s16, 1
    %p55 = por %p53, %p54
    %p57 = scmp.ne.s32.totalorder %s42, %s56
    %p58 = scmp.eq.s32.totalorder %s16, 0
    %p59 = por %p57, %p58
    %s61 = sadd.s32 %s60, 1
    %p64 = scmp.eq.s32.totalorder %s10, 1
    %p65 = scmp.ne.s32.totalorder %s60, %s62
    %p66 = scmp.eq.s32.totalorder %s10, 0
    %p67 = por %p65, %p66
    %p68 = scmp.ne.s32.totalorder %s60, %s62
    %p69 = scmp.eq.s32.totalorder %s15, 1
    %p70 = por %p68, %p69
    %p71 = scmp.ne.s32.totalorder %s62, %s63
    %p72 = scmp.eq.s32.totalorder %s15, 0
    %p73 = por %p71, %p72
    %p74 = scmp.ne.s32.totalorder %s62, %s63
    %p75 = scmp.eq.s32.totalorder %s16, 1
    %p76 = por %p74, %p75
    %p78 = scmp.ne.s32.totalorder %s63, %s77
    %p79 = scmp.eq.s32.totalorder %s16, 0
    %p80 = por %p78, %p79
    %s81 = ssub.s32 %s10, %s17
    %p82 = scmp.eq.s32.totalorder %s81, 0
    %s84 = sadd.s32 %s83, 1
    %s85 = scalar_select %p82, %s83, %s84
    %p88 = pneg %p82
    %p89 = scmp.eq.s32.totalorder %s10, 1
    %p90 = por %p88, %p89
    %p91 = scmp.ne.s32.totalorder %s83, %s86
    %p92 = scmp.eq.s32.totalorder %s10, 0
    %p93 = por %p91, %p92
    %p94 = scmp.ne.s32.totalorder %s83, %s86
    %p95 = scmp.eq.s32.totalorder %s15, 1
    %p96 = por %p94, %p95
    %p97 = scmp.ne.s32.totalorder %s86, %s87
    %p98 = scmp.eq.s32.totalorder %s15, 0
    %p99 = por %p97, %p98
    %p100 = scmp.ne.s32.totalorder %s86, %s87
    %p101 = scmp.eq.s32.totalorder %s16, 1
    %p102 = por %p100, %p101
    %p104 = scmp.ne.s32.totalorder %s87, %s103
    %p105 = scmp.eq.s32.totalorder %s16, 0
    %p106 = por %p104, %p105
    %s107 = ssub.s32 %s10, %s17
    %p108 = scmp.eq.s32.totalorder %s107, 0
    %s110 = sadd.s32 %s109, 1
    %s111 = scalar_select %p108, %s109, %s110
    %p114 = pneg %p108
    %p115 = scmp.eq.s32.totalorder %s10, 1
    %p116 = por %p114, %p115
    %p117 = scmp.ne.s32.totalorder %s109, %s112
    %p118 = scmp.eq.s32.totalorder %s10, 0
    %p119 = por %p117, %p118
    %p120 = scmp.ne.s32.totalorder %s109, %s112
    %p121 = scmp.eq.s32.totalorder %s15, 1
    %p122 = por %p120, %p121
    %p123 = scmp.ne.s32.totalorder %s112, %s113
    %p124 = scmp.eq.s32.totalorder %s15, 0
    %p125 = por %p123, %p124
    %p126 = scmp.ne.s32.totalorder %s112, %s113
    %p127 = scmp.eq.s32.totalorder %s16, 1
    %p128 = por %p126, %p127
    %p130 = scmp.ne.s32.totalorder %s113, %s129
    %p131 = scmp.eq.s32.totalorder %s16, 0
    %p132 = por %p130, %p131
    %p133 = scmp.le.s32.totalorder 1, %s10
    %p134 = scmp.lt.s32.totalorder %s10, 3
    %p135 = pnand %p133, %p134
    %p136 = pneg %p135
    // Predicated region
    $region9: #{conv_block_forward.3} parent=5 // pred_check
      _
    $region10: #{conv_block_forward.3} parent=5 // pred_check_branch
      %138 = sbr.rel (%p135) target = $region12
    $region11: #{conv_block_forward.3} parent=5 // pred_region
      %s139 = ssub.s32 %s10, 1
      // Predicated region
      $region13: #{conv_block_forward.3} parent=11 // pred_check
        %p140 = pneg %p31
      $region14: #{conv_block_forward.3} parent=11 // pred_check_branch
        %142 = sbr.rel (%p140) target = $region16
      $region15: #{conv_block_forward.3} parent=11 // pred_region
        _
      $region16: #{conv_block_forward.3} parent=11 // pred_fallthru
        _
      // Predicated region
      $region17: #{conv_block_forward.3} parent=11 // pred_check
        %p143 = pneg %p52
      $region18: #{conv_block_forward.3} parent=11 // pred_check_branch
        %145 = sbr.rel (%p143) target = $region20
      $region19: #{conv_block_forward.3} parent=11 // pred_region
        _
      $region20: #{conv_block_forward.3} parent=11 // pred_fallthru
        _
      // Predicated region
      $region21: #{conv_block_forward.3} parent=11 // pred_check
        %p146 = pneg %p73
      $region22: #{conv_block_forward.3} parent=11 // pred_check_branch
        %148 = sbr.rel (%p146) target = $region24
      $region23: #{conv_block_forward.3} parent=11 // pred_region
        _
      $region24: #{conv_block_forward.3} parent=11 // pred_fallthru
        _
    $region12: #{conv_block_forward.3} parent=5 // pred_fallthru
      _
    %p149 = scmp.lt.s32.totalorder %s10, 2
    // Predicated region
    $region25: #{conv_block_forward.3} parent=5 // pred_check
      %p150 = pneg %p149
    $region26: #{conv_block_forward.3} parent=5 // pred_check_branch
      %152 = sbr.rel (%p150) target = $region28
    $region27: #{conv_block_forward.3} parent=5 // pred_region
      // Predicated region
      $region29: #{conv_block_forward.3} parent=27 // pred_check
        %p153 = pneg %p93
      $region30: #{conv_block_forward.3} parent=27 // pred_check_branch
        %155 = sbr.rel (%p153) target = $region32
      $region31: #{conv_block_forward.3} parent=27 // pred_region
        %s156 = smul.u32 2, %s10
        %p157 = scmp.lt.s32.totalorder %s156, 3
        %s158 = scalar_select %p157, %s156, 3
        %s159 = smul.addr %s158, 8
        %s160 = scalar_lea.vmem %s3, %s159
        %s161 = smul.u32 2, %s10
      $region32: #{conv_block_forward.3} parent=27 // pred_fallthru
        _
    $region28: #{conv_block_forward.3} parent=5 // pred_fallthru
      _
    %p162 = scmp.le.s32.totalorder 1, %s10
    %p163 = scmp.lt.s32.totalorder %s10, 3
    %p164 = pnand %p162, %p163
    %p165 = pneg %p164
    // Predicated region
    $region33: #{conv_block_forward.3} parent=5 // pred_check
      _
    $region34: #{conv_block_forward.3} parent=5 // pred_check_branch
      %167 = sbr.rel (%p164) target = $region36
    $region35: #{conv_block_forward.3} parent=5 // pred_region
      %s168 = ssub.s32 %s10, 1
      %p169 = pneg %p31
      %p170 = pneg %p28
      %p171 = pneg %p52
      %p172 = pneg %p49
      %p173 = pneg %p73
      %p174 = pneg %p70
      %s175 = smul.u32 2, %s15
      %p176 = scmp.lt.s32.totalorder %s175, 3
      %s177 = scalar_select %p176, %s175, 3
      %s178 = smul.addr %s177, 8
      %s179 = scalar_lea.vmem %s3, %s178
      %p180 = pneg %p99
      %p181 = pneg %p96
      %p182 = pneg %p125
      %p183 = pneg %p122
      %s184 = smul.u32 2, %s15
      %p185 = scmp.lt.s32.totalorder %s184, 3
      %s186 = scalar_select %p185, %s184, 3
      %s187 = smul.addr %s186, 8
      %s188 = scalar_lea.vmem %s4, %s187
      %s189 = smul.u32 2, %s15
      %p190 = scmp.lt.s32.totalorder %s189, 3
      %s191 = scalar_select %p190, %s189, 3
      %s192 = smul.addr %s191, 8
      %s193 = scalar_lea.vmem %s3, %s192
      %s194 = smul.u32 2, %s15
      %s195 = smul.u32 2, %s15
      %p196 = scmp.lt.s32.totalorder %s195, 3
      %s197 = scalar_select %p196, %s195, 3
      %s198 = smul.addr %s197, 8
      %s199 = scalar_lea.vmem %s4, %s198
      %s200 = smul.u32 2, %s15
      %v201 = vld [vmem:[%s0] sm:$0xff]
      %v202 = vld [vmem:[%s0 + $0x8] sm:$0xff]
      %vm203 = vcmask 15360
      %v204 = vsel %vm203, %v201, 0.0
      %v205 = vsel %vm203, %v202, 0.0
      %v206 = vadd.f32 %v204, %v205
      %v207 = vmul.f32 %v206, 0.001953125
      %v208 = vmul.f32 %v207, %v207
      %210 = vrot.lane.b32.xlu0 %v208, 1
      %v211 = vpop.permute.xlu0 %210
      %v213 = vsub.f32 %v207, %v211
      %v214 = vadd.f32 %v213, 1e-05
      %v215 = vrsqrt.pop %v214
      %v216 = vld [vmem:[%s1] sm:$0xff]
      %218 = vrot.lane.b32.xlu0 %v215, 127
      %v219 = vpop.permute.xlu0 %218
      %v221 = vmul.f32 %v216, %v219
      %v222 = vld [vmem:[%s2] sm:$0xff]
      %v223 = vmul.f32 %v207, %v221
      %v224 = vsub.f32 %v222, %v223
      %v225 = vld [vmem:[%s193] sm:$0xff]
      %v226 = vld [vmem:[%s193 + $0x8] sm:$0xff]
      %v227 = vmax.f32 %v225, 0.0
      %v228 = vmax.f32 %v226, 0.0
      %230 = vset.pattern.permute.xlu0 0
      %231 = vperm.xlu0 %230, %v221
      %v232 = vpop.permute.xlu0 %231
      %v234 = vmul.f32 %v227, %v232
      %v235 = vmul.f32 %v228, %v232
      %237 = vset.pattern.permute.xlu0 0
      %238 = vperm.xlu0 %237, %v224
      %v239 = vpop.permute.xlu0 %238
      %v241 = vadd.f32 %v234, %v239
      %v242 = vadd.f32 %v235, %v239
      %243 = vst [vmem:[%s199] sm:$0xff] %v241
      %244 = vst [vmem:[%s199 + $0x8] sm:$0xff] %v242
      %s245 = smul.u32 2, %s15
      %p246 = scmp.lt.s32.totalorder %s245, 3
      %s247 = scalar_select %p246, %s245, 3
      %s248 = smul.addr %s247, 8
      %s249 = scalar_lea.vmem %s4, %s248
      // Predicated region
      $region37: #{conv_block_forward.3} parent=35 // pred_check
        %p250 = pneg %p122
      $region38: #{conv_block_forward.3} parent=35 // pred_check_branch
        %252 = sbr.rel (%p250) target = $region40
      $region39: #{conv_block_forward.3} parent=35 // pred_region
        %s253 = smul.u32 2, %s15
      $region40: #{conv_block_forward.3} parent=35 // pred_fallthru
        _
    $region36: #{conv_block_forward.3} parent=5 // pred_fallthru
      _
    %p254 = scmp.le.s32.totalorder 2, %s10
    // Predicated region
    $region41: #{conv_block_forward.3} parent=5 // pred_check
      %p255 = pneg %p254
    $region42: #{conv_block_forward.3} parent=5 // pred_check_branch
      %257 = sbr.rel (%p255) target = $region44
    $region43: #{conv_block_forward.3} parent=5 // pred_region
      %s258 = ssub.s32 %s10, 2
      // Predicated region
      $region45: #{conv_block_forward.3} parent=43 // pred_check
        %p259 = pneg %p128
      $region46: #{conv_block_forward.3} parent=43 // pred_check_branch
        %261 = sbr.rel (%p259) target = $region48
      $region47: #{conv_block_forward.3} parent=43 // pred_region
        %s262 = smul.u32 2, %s16
        %p263 = scmp.lt.s32.totalorder %s262, 3
        %s264 = scalar_select %p263, %s262, 3
        %s265 = smul.addr %s264, 8
        %s266 = scalar_lea.vmem %s4, %s265
      $region48: #{conv_block_forward.3} parent=43 // pred_fallthru
        _
    $region44: #{conv_block_forward.3} parent=5 // pred_fallthru
      _
  $region6: #{conv_block_forward.3} parent=0 // loop_footer
    %s14 = sadd.s32 1, %s10
  $region7: #{conv_block_forward.3} parent=0 // loop_footer_branch
    %9 = sbr.rel target = $region3
  $region8: #{conv_block_forward.3} parent=0 // loop_exit
    _

</llo_original>
